<compile_context>
chip_gen: v5e
topology: v5e:2x2
jax: 0.10.0
libtpu: 0.0.40
codegen_flags: <defaults>
</compile_context>

<pallas_src>
import math

import jax
import jax.numpy as jnp
from jax.experimental import pallas as pl
from jax.experimental.pallas import tpu as pltpu


def find_factor(n):
    """Finds the most balanced integer factors for n (same as the PyTorch helper)."""
    for i in range(int(n ** 0.5), 0, -1):
        if n % i == 0:
            return (i, n // i)
    return (1, n)


def _round_up(x, m):
    return ((x + m - 1) // m) * m


def _pick_tk(d_in, tk):
    """K tile that exactly divides d_in (lane-aligned), or the full d_in.

    An exact divisor avoids ragged blocks on the reduction axis (whose out-of-range
    contents would otherwise contaminate the accumulation)."""
    if d_in <= tk:
        return d_in
    for cand in range((min(tk, d_in) // 128) * 128, 0, -128):
        if d_in % cand == 0:
            return cand
    return d_in  # no aligned divisor; carry full d_in (correct, may cost extra VMEM)


def _derived_vmem_limit(tm, tk, tn, in_itemsize, out_itemsize):
    """VMEM limit derived from the actual (double-buffered) block footprint + headroom."""
    need = 2 * (tm * tk * in_itemsize      # x block (double-buffered)
                + tk * tn * in_itemsize    # fused-weight block
                + tn * 4                   # bias block (f32)
                + tm * tn * out_itemsize)  # output block
    need += tm * tn * 4                    # f32 accumulator scratch (single buffer)
    need += 4 * 1024 * 1024                # Mosaic internal-scratch headroom
    try:
        cap = int(getattr(pltpu.get_tpu_info(), "vmem_capacity_bytes", 64 * 1024 * 1024))
    except Exception:
        cap = 64 * 1024 * 1024
    return int(max(16 * 1024 * 1024, min(need, cap - 4 * 1024 * 1024)))


def _fused_lora_kernel(x_ref, w_ref, b_ref, o_ref, acc_ref):
    # grid = (j: d_out tiles [outer], i: row tiles, k: d_in tiles [innermost, "arbitrary"])
    # x_ref: (tm, tk)  activation tile          w_ref: (tk, tn)  fused weight tile
    # b_ref: (1,  tn)  f32 bias tile            o_ref: (tm, tn)  output tile
    # acc_ref: (tm, tn) f32 accumulator scratch (persists across the k sweep)
    k = pl.program_id(2)

    @pl.when(k == 0)
    def _():
        acc_ref[...] = jnp.zeros_like(acc_ref)

    acc_ref[...] += jnp.dot(x_ref[...], w_ref[...], preferred_element_type=jnp.float32)

    @pl.when(k == pl.num_programs(2) - 1)
    def _():
        o_ref[...] = (acc_ref[...] + b_ref[...]).astype(o_ref.dtype)


def prepare_lora_params(w_base, b_base, w1, w2, *, scaling=1.0, compute_dtype=jnp.bfloat16):
    """Fold base + scaled NdLinear-LoRA adapter into one effective (d_in, d_out_pad) weight.

    Call ONCE at parameter-load time (outside the per-step jit); do not re-fuse per forward.
    Returns (w_eff_t_padded, bias_padded_f32_row, d_out).
    """
    d_out, d_in = w_base.shape
    w_eff = w_base.astype(jnp.float32) + float(scaling) * jnp.kron(
        w1.astype(jnp.float32), w2.astype(jnp.float32))          # (d_out, d_in), exact in f32
    w_eff_t = w_eff.T                                            # (d_in, d_out)

    d_out_p = _round_up(d_out, 128)                              # lane-dense column width
    if d_out_p != d_out:
        w_eff_t = jnp.pad(w_eff_t, ((0, 0), (0, d_out_p - d_out)))
        b_pad = jnp.pad(b_base.astype(jnp.float32), (0, d_out_p - d_out))
    else:
        b_pad = b_base.astype(jnp.float32)

    if compute_dtype is not None:
        w_eff_t = w_eff_t.astype(compute_dtype)
    return w_eff_t, b_pad.reshape(1, d_out_p), d_out


def linear_with_ndlinear_lora_prepped(x, w_eff_t, b_pad, d_out, *, tm=512, tn=512, tk=1024,
                                      compute_dtype=jnp.bfloat16, out_dtype=None):
    """Forward with pre-fused parameters: y = x @ W_eff^T + b."""
    d_in, d_out_p = w_eff_t.shape
    orig_shape = x.shape
    assert orig_shape[-1] == d_in
    out_dtype = out_dtype or x.dtype

    xf = x.reshape(-1, d_in)
    if compute_dtype is not None and xf.dtype != compute_dtype:
        xf = xf.astype(compute_dtype)
    n = xf.shape[0]

    # Row tile: multiple of 8 sublanes; ragged last row block is masked by Pallas.
    tm_eff = min(tm, _round_up(n, 8))
    tm_eff = max(8, (tm_eff // 8) * 8)
    # Column tile: multiple of 128 lanes (d_out_p already is).
    tn_eff = min(tn, d_out_p)
    # K tile: exact divisor of d_in (or full d_in).
    tk_eff = _pick_tk(d_in, tk)

    n_i = pl.cdiv(n, tm_eff)
    # Decode-shaped inputs on v7x: keep >=2 column tiles so the "parallel" grid can
    # actually split across the two TensorCores.
    if n_i == 1 and tn_eff == d_out_p and d_out_p >= 256:
        tn_eff = max(128, _round_up(d_out_p // 2, 128))
    n_j = pl.cdiv(d_out_p, tn_eff)
    n_k = pl.cdiv(d_in, tk_eff)

    # Output columns: unpadded when possible (masked store only on the ragged final column
    # tile) to avoid a post-kernel slice copy; tiny d_out (<128, non-multiple) keeps the
    # padded output + negligible slice.
    slice_after = (d_out_p != d_out) and (d_out < 128)
    out_cols = d_out_p if slice_after else d_out

    in_itemsize = max(jnp.dtype(xf.dtype).itemsize, jnp.dtype(w_eff_t.dtype).itemsize)
    out_itemsize = jnp.dtype(out_dtype).itemsize
    vmem_limit = _derived_vmem_limit(tm_eff, tk_eff, tn_eff, in_itemsize, out_itemsize)

    cost = pl.CostEstimate(
        flops=int(2 * n * d_in * d_out_p),
        transcendentals=0,
        bytes_accessed=int(xf.size * jnp.dtype(xf.dtype).itemsize
                           + w_eff_t.size * jnp.dtype(w_eff_t.dtype).itemsize
                           + b_pad.size * 4
                           + n * out_cols * out_itemsize),
    )

    out = pl.pallas_call(
        _fused_lora_kernel,
        out_shape=jax.ShapeDtypeStruct((n, out_cols), out_dtype),
        grid_spec=pltpu.PrefetchScalarGridSpec(
            num_scalar_prefetch=0,
            grid=(n_j, n_i, n_k),                                     # j outer, i middle, k inner
            in_specs=[
                pl.BlockSpec((tm_eff, tk_eff), lambda j, i, k: (i, k)),   # activation tile
                pl.BlockSpec((tk_eff, tn_eff), lambda j, i, k: (k, j)),   # fused weight tile
                pl.BlockSpec((1, tn_eff), lambda j, i, k: (0, j)),        # f32 bias tile
            ],
            out_specs=pl.BlockSpec((tm_eff, tn_eff), lambda j, i, k: (i, j)),
            scratch_shapes=[pltpu.VMEM((tm_eff, tn_eff), jnp.float32)],   # f32 accumulator
        ),
        compiler_params=pltpu.CompilerParams(
            dimension_semantics=("parallel", "parallel", "arbitrary"),
            vmem_limit_bytes=vmem_limit,
        ),
        cost_estimate=cost,
    )(xf, w_eff_t, b_pad)

    if slice_after:
        out = out[:, :d_out]
    return out.reshape(*orig_shape[:-1], d_out)


def linear_with_ndlinear_lora(x, w_base, b_base, w1, w2, *, scaling=1.0, tm=512, tn=512,
                              tk=1024, compute_dtype=jnp.bfloat16):
    """Convenience wrapper. NOTE: re-fuses the weight every call — for real use, call
    prepare_lora_params() once at load time and linear_with_ndlinear_lora_prepped() per step."""
    w_eff_t, b_pad, d_out = prepare_lora_params(
        w_base, b_base, w1, w2, scaling=scaling, compute_dtype=compute_dtype)
    return linear_with_ndlinear_lora_prepped(
        x, w_eff_t, b_pad, d_out, tm=tm, tn=tn, tk=tk, compute_dtype=compute_dtype)


if __name__ == "__main__":
    # Small shapes consistent with the module: batch=2, seq=8, d_in=32, d_out=64.
    d_in, d_out = 32, 64
    alpha = 1.0
    f1, f2 = find_factor(d_in)    # (4, 8)
    g1, g2 = find_factor(d_out)   # (8, 8)

    key = jax.random.PRNGKey(0)
    k1, k2, k3, k4, k5 = jax.random.split(key, 5)

    # Deterministic parameter init (PyTorch-Linear-style uniform bounds).
    bnd_b = 1.0 / math.sqrt(d_in)
    w_base = jax.random.uniform(k1, (d_out, d_in), jnp.float32, -bnd_b, bnd_b)
    b_base = jax.random.uniform(k2, (d_out,), jnp.float32, -bnd_b, bnd_b)
    w1 = jax.random.uniform(k3, (g1, f1), jnp.float32, -1.0 / math.sqrt(f1), 1.0 / math.sqrt(f1))
    w2 = jax.random.uniform(k4, (g2, f2), jnp.float32, -1.0 / math.sqrt(f2), 1.0 / math.sqrt(f2))

    x = jax.random.normal(k5, (2, 8, d_in), jnp.float32)

    # Pure-JAX reference of the exact PyTorch forward (eval mode: dropout = identity).
    base_ref = jnp.einsum('bsd,od->bso', x, w_base) + b_base
    x3 = x.reshape(-1, f1, f2)
    y3 = jnp.einsum('bij,pi,qj->bpq', x3, w1, w2)
    ref = base_ref + alpha * y3.reshape(2, 8, d_out)

    # (a) f32 compute path: verifies the kron fold / kernel math exactly.
    wt32, bp32, d_out_real = prepare_lora_params(
        w_base, b_base, w1, w2, scaling=alpha, compute_dtype=jnp.float32)
    out32 = jax.block_until_ready(
        linear_with_ndlinear_lora_prepped(x, wt32, bp32, d_out_real,
                                          compute_dtype=jnp.float32))
    assert out32.shape == (2, 8, d_out)
    assert jnp.allclose(out32, ref, atol=1e-4, rtol=1e-4), "f32 path mismatch vs reference"

    # (b) default bf16 compute path (MXU-native, f32 accumulate) with a looser tolerance.
    wt, bp, d_out_real = prepare_lora_params(w_base, b_base, w1, w2, scaling=alpha)
    out = jax.block_until_ready(
        linear_with_ndlinear_lora_prepped(x, wt, bp, d_out_real))
    assert out.shape == (2, 8, d_out)
    assert jnp.allclose(out, ref, atol=5e-2, rtol=5e-2), "bf16 path mismatch vs reference"

    print("KERNEL_OK")
</pallas_src>

<mosaic_0001>
module attributes {stable_mosaic.version = 11 : i64} {
  func.func @_fused_lora_kernel(%arg0: i32, %arg1: i32, %arg2: i32, %arg3: memref<16x32xf32, #tpu.memory_space<vmem>>, %arg4: memref<32x128xf32, #tpu.memory_space<vmem>>, %arg5: memref<1x128xf32, #tpu.memory_space<vmem>>, %arg6: memref<16x128xf32, #tpu.memory_space<vmem>>, %arg7: memref<16x128xf32, #tpu.memory_space<vmem>>) attributes {dimension_semantics = [#tpu.dimension_semantics<parallel>, #tpu.dimension_semantics<parallel>, #tpu.dimension_semantics<arbitrary>], iteration_bounds = array<i64: 1, 1, 1>, scalar_prefetch = 0 : i64, scratch_operands = 1 : i64, tpu.core_type = #tpu.core_type<tc>, window_params = [{transform_indices = @transform_0, window_bounds = array<i64: 16, 32>}, {transform_indices = @transform_1, window_bounds = array<i64: 32, 128>}, {transform_indices = @transform_2, window_bounds = array<i64: 1, 128>}, {transform_indices = @transform_3, window_bounds = array<i64: 16, 128>}]} {
    %c0_i32 = arith.constant 0 : i32
    %0 = arith.cmpi eq, %arg2, %c0_i32 : i32
    %1 = arith.extui %0 : i1 to i32
    %c0_i32_0 = arith.constant 0 : i32
    %2 = arith.cmpi ne, %1, %c0_i32_0 : i32
    scf.if %2 {
      %cst_10 = arith.constant 0.000000e+00 : f32
      %12 = vector.broadcast %cst_10 : f32 to vector<16x128xf32>
      %c0_11 = arith.constant 0 : index
      %c0_12 = arith.constant 0 : index
      %13 = vector.load %arg7[%c0_11, %c0_12] : memref<16x128xf32, #tpu.memory_space<vmem>>, vector<16x128xf32>
      tpu.vector_store %arg7[%c0_11, %c0_12], %12 {strides = array<i32>} : memref<16x128xf32, #tpu.memory_space<vmem>>, vector<16x128xf32>,
    } else {
    }
    %c0 = arith.constant 0 : index
    %c0_1 = arith.constant 0 : index
    %3 = vector.load %arg7[%c0, %c0_1] : memref<16x128xf32, #tpu.memory_space<vmem>>, vector<16x128xf32>
    %c0_2 = arith.constant 0 : index
    %c0_3 = arith.constant 0 : index
    %4 = vector.load %arg3[%c0_2, %c0_3] : memref<16x32xf32, #tpu.memory_space<vmem>>, vector<16x32xf32>
    %c0_4 = arith.constant 0 : index
    %c0_5 = arith.constant 0 : index
    %5 = vector.load %arg4[%c0_4, %c0_5] : memref<32x128xf32, #tpu.memory_space<vmem>>, vector<32x128xf32>
    %cst = arith.constant dense<0.000000e+00> : vector<16x128xf32>
    %6 = tpu.matmul %4, %5, %cst {dimension_numbers = #tpu.dot_dimension_numbers<[1], [0], [0], [1], [0, 0, 1, 1], [], []>} : vector<16x32xf32>, vector<32x128xf32>, vector<16x128xf32> -> vector<16x128xf32>
    %7 = arith.addf %3, %6 : vector<16x128xf32>
    %c0_6 = arith.constant 0 : index
    %c0_7 = arith.constant 0 : index
    %8 = vector.load %arg7[%c0_6, %c0_7] : memref<16x128xf32, #tpu.memory_space<vmem>>, vector<16x128xf32>
    tpu.vector_store %arg7[%c0_6, %c0_7], %7 {strides = array<i32>} : memref<16x128xf32, #tpu.memory_space<vmem>>, vector<16x128xf32>,
    %c0_i32_8 = arith.constant 0 : i32
    %9 = arith.cmpi eq, %arg2, %c0_i32_8 : i32
    %10 = arith.extui %9 : i1 to i32
    %c0_i32_9 = arith.constant 0 : i32
    %11 = arith.cmpi ne, %10, %c0_i32_9 : i32
    scf.if %11 {
      %c0_10 = arith.constant 0 : index
      %c0_11 = arith.constant 0 : index
      %12 = vector.load %arg7[%c0_10, %c0_11] : memref<16x128xf32, #tpu.memory_space<vmem>>, vector<16x128xf32>
      %c0_12 = arith.constant 0 : index
      %c0_13 = arith.constant 0 : index
      %13 = vector.load %arg5[%c0_12, %c0_13] : memref<1x128xf32, #tpu.memory_space<vmem>>, vector<1x128xf32>
      %14 = vector.broadcast %13 : vector<1x128xf32> to vector<16x128xf32>
      %15 = arith.addf %12, %14 : vector<16x128xf32>
      %c0_14 = arith.constant 0 : index
      %c0_15 = arith.constant 0 : index
      %16 = vector.load %arg6[%c0_14, %c0_15] : memref<16x128xf32, #tpu.memory_space<vmem>>, vector<16x128xf32>
      tpu.vector_store %arg6[%c0_14, %c0_15], %15 {strides = array<i32>} : memref<16x128xf32, #tpu.memory_space<vmem>>, vector<16x128xf32>,
    } else {
    }
    return
  }
  func.func @transform_0(%arg0: i32, %arg1: i32, %arg2: i32) -> (i32, i32) {
    %c0_i32 = arith.constant 0 : i32
    return %arg1, %arg2 : i32, i32
  }
  func.func @transform_1(%arg0: i32, %arg1: i32, %arg2: i32) -> (i32, i32) {
    %c0_i32 = arith.constant 0 : i32
    return %arg2, %arg0 : i32, i32
  }
  func.func @transform_2(%arg0: i32, %arg1: i32, %arg2: i32) -> (i32, i32) {
    %c0_i32 = arith.constant 0 : i32
    %c0_i32_0 = arith.constant 0 : i32
    return %c0_i32, %arg0 : i32, i32
  }
  func.func @transform_3(%arg0: i32, %arg1: i32, %arg2: i32) -> (i32, i32) {
    %c0_i32 = arith.constant 0 : i32
    return %arg1, %arg0 : i32, i32
  }
}

</mosaic_0001>

<llo_original>
// kernel: tpu_custom_call.1
$region0: #{tpu_custom_call.1}
  #allocation0 [shape = 'u32[]', space=smem, size = 0x4, offset = 0x4, fixed_abs, tag = 'smem constant byte address 0x4 - core index']
  #allocation1 [shape = 'u32[72,128]{1,0:T(1,128)}', space=vmem, size = 0x9000, scoped, tag = 'internal scratch']
  #allocation2 [shape = 'f32[16,128]{1,0:T(8,128)}', space=vmem, size = 0x2000, scoped, tag = 'scratch operand']
  %s0 = inlined_call_operand.hbm [shape: f32[16,32], index: 0, kind: input, shape index: {}]
  %s1 = inlined_call_operand.hbm [shape: f32[32,128], index: 1, kind: input, shape index: {}]
  %s2 = inlined_call_operand.vmem [shape: f32[1,128], index: 2, kind: input, shape index: {}]
  %s3 = inlined_call_operand.hbm [shape: f32[16,128], index: 3, kind: output, shape index: {}]
  %s4 = sld [smem:[#allocation0]]
  $region38: #{tpu_custom_call.1} parent=0
    _
  %s6 = ssub.s32 1, %s4
  %s7 = scalar_select 0, %s6, %s4
  $region1: #{tpu_custom_call.1} parent=0
    #allocation3 [shape = 'u8[8192]{0}', space=vmem, size = 0x2000, scoped, tag = 'input window, operand 0, single buffered']
    #allocation4 [shape = 's32[1]{0}', space=sflag, size = 0x4, scoped, tag = 'scoped memory for tpu_custom_call.1']
    #allocation5 [shape = 's32[1]{0}', space=sflag, size = 0x4, scoped, tag = 'scoped memory for tpu_custom_call.1']
    #allocation6 [shape = 'u8[16384]{0}', space=vmem, size = 0x4000, scoped, tag = 'input window, operand 1, single buffered']
    #allocation7 [shape = 's32[1]{0}', space=sflag, size = 0x4, scoped, tag = 'scoped memory for tpu_custom_call.1']
    #allocation8 [shape = 'u8[8192]{0}', space=vmem, size = 0x2000, scoped, tag = 'output window, operand 0, single buffered']
    %8 = vsyncpa [#allocation4], 0
    %9 = vsyncpa [#allocation7], 0
    %10 = vsyncpa [#allocation5], 0
    // Predicated region
    $region2: #{tpu_custom_call.1} parent=1 // pred_check
      _
    $region3: #{tpu_custom_call.1} parent=1 // pred_check_branch
      %12 = sbr.rel (0) target = $region5
    $region4: #{tpu_custom_call.1} parent=1 // pred_region
      %14 = vsyncadd [#allocation4], 0
      %s15 = sshll.u32 %s0, 4
      %s16 = int_to_ptr.hbm [resolvable:$true] %s15
      %s17 = sshll.u32 [#allocation3], 4
      %s18 = int_to_ptr.vmem [resolvable:$true] %s17
      %23 = dma.hbm_to_vmem [thread:$0]  %s16, 256, %s18, [#allocation4], 128, 128, 8
    $region5: #{tpu_custom_call.1} parent=1 // pred_fallthru
      _
    // Predicated region
    $region6: #{tpu_custom_call.1} parent=1 // pred_check
      _
    $region7: #{tpu_custom_call.1} parent=1 // pred_check_branch
      %25 = sbr.rel (0) target = $region9
    $region8: #{tpu_custom_call.1} parent=1 // pred_region
      %27 = vsyncadd [#allocation7], 0
      %s28 = sshll.u32 %s1, 4
      %s29 = int_to_ptr.hbm [resolvable:$true] %s28
      %s30 = sshll.u32 [#allocation6], 4
      %s31 = int_to_ptr.vmem [resolvable:$true] %s30
      %36 = dma.hbm_to_vmem [thread:$0]  %s29, 512, %s31, [#allocation7], 128, 128, 8
    $region9: #{tpu_custom_call.1} parent=1 // pred_fallthru
      _
    // Predicated region
    $region10: #{tpu_custom_call.1} parent=1 // pred_check
      _
    $region11: #{tpu_custom_call.1} parent=1 // pred_check_branch
      %38 = sbr.rel (0) target = $region13
    $region12: #{tpu_custom_call.1} parent=1 // pred_region
      _
    $region13: #{tpu_custom_call.1} parent=1 // pred_fallthru
      _
    // Predicated region
    $region14: #{tpu_custom_call.1} parent=1 // pred_check
      _
    $region15: #{tpu_custom_call.1} parent=1 // pred_check_branch
      %40 = sbr.rel (0) target = $region17
    $region16: #{tpu_custom_call.1} parent=1 // pred_region
      %42 = dma.done [#allocation4], 256
    $region17: #{tpu_custom_call.1} parent=1 // pred_fallthru
      _
    // Predicated region
    $region18: #{tpu_custom_call.1} parent=1 // pred_check
      _
    $region19: #{tpu_custom_call.1} parent=1 // pred_check_branch
      %44 = sbr.rel (0) target = $region21
    $region20: #{tpu_custom_call.1} parent=1 // pred_region
      %46 = dma.done [#allocation7], 512
    $region21: #{tpu_custom_call.1} parent=1 // pred_fallthru
      _
    %p47 = scmp.eq.s32.totalorder 0, 0
    // Predicated region
    $region22: #{tpu_custom_call.1} parent=1 // pred_check
      %p48 = pneg %p47
    $region23: #{tpu_custom_call.1} parent=1 // pred_check_branch
      %50 = sbr.rel (%p48) target = $region25
    $region24: #{tpu_custom_call.1} parent=1 // pred_region
      %51 = vst [vmem:[#allocation2] sm:$0xff] 0.0
      %52 = vst [vmem:[#allocation2 + $0x8] sm:$0xff] 0.0
    $region25: #{tpu_custom_call.1} parent=1 // pred_fallthru
      _
    %v53 = vld [vmem:[#allocation2] sm:$0xff]
    %v54 = vld [vmem:[#allocation2 + $0x8] sm:$0xff]
    %v55 = vld [vmem:[#allocation3] sm:$0xff]
    %v56 = vld [vmem:[#allocation3 + $0x8] sm:$0xff]
    %v57 = vld [vmem:[#allocation6] sm:$0xff]
    %v58 = vld [vmem:[#allocation6 + $0x8] sm:$0xff]
    %v59 = vld [vmem:[#allocation6 + $0x10] sm:$0xff]
    %v60 = vld [vmem:[#allocation6 + $0x18] sm:$0xff]
    %vm61 = vcmask 261120
    %v63 = vsel %vm61, %v55, 0
    %v66 = vsel %vm61, %v56, 0
    %68 = vmatpush.msra.mxu0 0.0
    %69 = vmatpush.msra.mxu0 0.0
    %70 = vmatpush.msra.mxu0 0.0
    %71 = vmatpush.msra.mxu0 0.0
    %72 = vmatpush.msra.mxu0 0.0
    %73 = vmatpush.msra.mxu0 0.0
    %74 = vmatpush.msra.mxu0 0.0
    %75 = vmatpush.msra.mxu0 0.0
    %76 = vmatpush.msra.mxu0 0.0
    %77 = vmatpush.msra.mxu0 0.0
    %78 = vmatpush.msra.mxu0 0.0
    %79 = vmatpush.msra.mxu0 0.0
    %80 = vmatpush.msra.mxu0 %v60
    %81 = vmatpush.msra.mxu0 %v59
    %82 = vmatpush.msra.mxu0 %v58
    %83 = vmatpush.msra.mxu0 %v57
    %84 = vmatmul.f32.gmra.mxu0 %v63
    %v85 = vpop.f32.mrf.mxu0
    %v86 = vadd.f32 0.0, %v85
    %87 = vmatmul.f32.gmra.mxu0 %v66
    %v88 = vpop.f32.mrf.mxu0
    %v89 = vadd.f32 0.0, %v88
    %90 = vdwg.mxu0
    %v91 = vadd.f32 %v53, %v86
    %v92 = vadd.f32 %v54, %v89
    %93 = vst [vmem:[#allocation2] sm:$0xff] %v91
    %94 = vst [vmem:[#allocation2 + $0x8] sm:$0xff] %v92
    // Predicated region
    $region26: #{tpu_custom_call.1} parent=1 // pred_check
      %p95 = pneg %p47
    $region27: #{tpu_custom_call.1} parent=1 // pred_check_branch
      %97 = sbr.rel (%p95) target = $region29
    $region28: #{tpu_custom_call.1} parent=1 // pred_region
      %v98 = vld [vmem:[#allocation2] sm:$0xff]
      %v99 = vld [vmem:[#allocation2 + $0x8] sm:$0xff]
      %v100 = vld [vmem:[%s2] sm:$0x1]
      %v102 = vperm.slane %v100, 0
      %v104 = vadd.f32 %v98, %v102
      %v105 = vadd.f32 %v99, %v102
      %106 = vst [vmem:[#allocation8] sm:$0xff] %v104
      %107 = vst [vmem:[#allocation8 + $0x8] sm:$0xff] %v105
    $region29: #{tpu_custom_call.1} parent=1 // pred_fallthru
      _
    // Predicated region
    $region30: #{tpu_custom_call.1} parent=1 // pred_check
      _
    $region31: #{tpu_custom_call.1} parent=1 // pred_check_branch
      %109 = sbr.rel (0) target = $region33
    $region32: #{tpu_custom_call.1} parent=1 // pred_region
      %111 = vsyncadd [#allocation5], 0
      %s112 = sshll.u32 [#allocation8], 4
      %s113 = int_to_ptr.vmem [resolvable:$true] %s112
      %s114 = sshll.u32 %s3, 4
      %s115 = int_to_ptr.hbm [resolvable:$true] %s114
      %120 = dma.vmem_to_hbm [thread:$0]  %s113, 256, %s115, [#allocation5], 128, 128, 8
    $region33: #{tpu_custom_call.1} parent=1 // pred_fallthru
      _
    // Predicated region
    $region34: #{tpu_custom_call.1} parent=1 // pred_check
      _
    $region35: #{tpu_custom_call.1} parent=1 // pred_check_branch
      %122 = sbr.rel (0) target = $region37
    $region36: #{tpu_custom_call.1} parent=1 // pred_region
      %124 = dma.done [#allocation5], 256
    $region37: #{tpu_custom_call.1} parent=1 // pred_fallthru
      _
    %125 = vsyncpa [#allocation4], 1
    %126 = vsyncpa [#allocation7], 1
    %127 = vsyncpa [#allocation5], 1

</llo_original>
